<compile_context>
chip_gen: v7x
topology: tpu7x:2x2x1
jax: 0.10.0
libtpu: 0.0.40
codegen_flags: <defaults>
</compile_context>

<pallas_src>
import functools

import jax
import jax.numpy as jnp
from jax.experimental import pallas as pl
from jax.experimental.pallas import tpu as pltpu


_TARGET_BLOCK_BYTES = 1 << 20          # ~1 MiB per x block (out block is same size)
_VMEM_LIMIT_BYTES = 32 * 1024 * 1024   # safe on v5e/v6e/v7x; > v5e's 16 MiB default


# --------------------------------------------------------------------------
# Tiling helpers
# --------------------------------------------------------------------------
def _round_up(x, m):
    return (x + m - 1) // m * m


def _itemsize(dtype):
    return jnp.dtype(dtype).itemsize


def _sublane_align(dtype):
    # 32-bit -> 8, 16-bit -> 16, 8-bit -> 32 (sub-32-bit dtypes pack sublanes).
    return max(8, 32 // _itemsize(dtype))


def _pick_tile(total, align, row_bytes, other_steps=1,
               target_bytes=_TARGET_BLOCK_BYTES):
    """Tile along a streamed (non-reduction) axis.

    Returns a multiple of `align` (or the full axis), sized for ~target_bytes
    per block, never larger than the axis, and split so the grid has >=2 steps
    when no other axis already provides parallelism (v7x dual-TC)."""
    if total <= align:
        return total                                   # full dim is always legal
    down = (total // align) * align                     # largest aligned tile <= total
    tile = max(align, (target_bytes // max(row_bytes, 1)) // align * align)
    tile = min(tile, down)
    if other_steps < 2 and pl.cdiv(total, tile) < 2:
        tile = min(down, max(align, _round_up(pl.cdiv(total, 2), align)))
    return tile


# --------------------------------------------------------------------------
# Pallas kernels
# --------------------------------------------------------------------------
def _ln_channels_first_kernel(x_ref, w_ref, b_ref, o_ref, *, eps):
    """Block: x (C, T) with spatial on lanes; normalize over C (sublanes)."""
    x = x_ref[...].astype(jnp.float32)                   # (C, T)
    mean = jnp.mean(x, axis=0, keepdims=True)            # (1, T)
    xc = x - mean
    var = jnp.mean(xc * xc, axis=0, keepdims=True)       # biased var (matches torch)
    inv = jax.lax.rsqrt(var + eps)
    w = w_ref[...].astype(jnp.float32)                   # (C, 1) -> broadcast over T
    b = b_ref[...].astype(jnp.float32)
    o_ref[...] = (xc * inv * w + b).astype(o_ref.dtype)


def _ln_channels_last_kernel(x_ref, w_ref, b_ref, o_ref, *, eps):
    """Block: x (TN, C) with C >= 128-ish; normalize each row over C (lanes)."""
    x = x_ref[...].astype(jnp.float32)                   # (TN, C)
    mean = jnp.mean(x, axis=-1, keepdims=True)           # (TN, 1)
    xc = x - mean
    var = jnp.mean(xc * xc, axis=-1, keepdims=True)
    inv = jax.lax.rsqrt(var + eps)
    w = w_ref[...].astype(jnp.float32)                   # (1, C)
    b = b_ref[...].astype(jnp.float32)
    o_ref[...] = (xc * inv * w + b).astype(o_ref.dtype)


def _ln_channels_last_packed_kernel(x_ref, w_ref, b_ref, m_ref, o_ref, *, eps):
    """Block: x (TN, G) with G = r*C a multiple of 128 (lane-dense).

    Each lane row holds r independent rows of length C.  m is the (G, G)
    block-diagonal averaging matrix (1/C inside each CxC group), so one MXU
    matmul both reduces each group and broadcasts the result back across it —
    no masked stores, no sub-128-lane reshapes."""
    x = x_ref[...].astype(jnp.float32)                   # (TN, G)
    m = m_ref[...]                                       # (G, G) f32
    mean = jnp.dot(x, m, precision=jax.lax.Precision.HIGHEST,
                   preferred_element_type=jnp.float32)   # per-group mean, broadcast
    xc = x - mean
    var = jnp.dot(xc * xc, m, precision=jax.lax.Precision.HIGHEST,
                  preferred_element_type=jnp.float32)    # per-group biased var
    inv = jax.lax.rsqrt(var + eps)
    w = w_ref[...].astype(jnp.float32)                   # (1, G) = weight tiled r times
    b = b_ref[...].astype(jnp.float32)
    o_ref[...] = (xc * inv * w + b).astype(o_ref.dtype)


# --------------------------------------------------------------------------
# Wrappers
# --------------------------------------------------------------------------
def _layer_norm_channels_first(x, weight, bias, eps):
    B, C, H, W = x.shape
    HW = H * W
    x2 = x.reshape(B, C, HW)
    T = _pick_tile(HW, 128, C * _itemsize(x.dtype), other_steps=B)
    grid = (B, pl.cdiv(HW, T))
    w2 = weight.reshape(C, 1)
    b2 = bias.reshape(C, 1)

    out = pl.pallas_call(
        functools.partial(_ln_channels_first_kernel, eps=float(eps)),
        out_shape=jax.ShapeDtypeStruct((B, C, HW), x.dtype),
        grid=grid,
        in_specs=[
            pl.BlockSpec((None, C, T), lambda b, t: (b, 0, t)),
            pl.BlockSpec((C, 1), lambda b, t: (0, 0)),
            pl.BlockSpec((C, 1), lambda b, t: (0, 0)),
        ],
        out_specs=pl.BlockSpec((None, C, T), lambda b, t: (b, 0, t)),
        compiler_params=pltpu.CompilerParams(
            dimension_semantics=("parallel", "parallel"),
            vmem_limit_bytes=_VMEM_LIMIT_BYTES),
    )(x2, w2, b2)
    return out.reshape(B, C, H, W)


def _layer_norm_channels_last(x, weight, bias, eps):
    lead = x.shape[:-1]
    C = x.shape[-1]
    N = 1
    for d in lead:
        N *= d
    base = _sublane_align(x.dtype)
    itemsize = _itemsize(x.dtype)

    # Pack r rows per lane row when C is small so loads/stores are lane-dense.
    r = 1
    if C < 128 and 128 % C == 0 and (128 // C) > 1 and N % (128 // C) == 0:
        r = 128 // C
    G = r * C
    Np = N // r

    x2 = x.reshape(Np, G)                      # contiguous view, no data movement
    w2 = jnp.tile(weight.reshape(1, C), (1, r))
    b2 = jnp.tile(bias.reshape(1, C), (1, r))

    TN = _pick_tile(Np, base, G * itemsize, other_steps=1)
    grid = (pl.cdiv(Np, TN),)
    cparams = pltpu.CompilerParams(
        dimension_semantics=("parallel",),
        vmem_limit_bytes=_VMEM_LIMIT_BYTES)

    if r > 1:
        gidx = jnp.arange(G, dtype=jnp.int32) // C
        m = (gidx[:, None] == gidx[None, :]).astype(jnp.float32) * (1.0 / C)
        out = pl.pallas_call(
            functools.partial(_ln_channels_last_packed_kernel, eps=float(eps)),
            out_shape=jax.ShapeDtypeStruct((Np, G), x.dtype),
            grid=grid,
            in_specs=[
                pl.BlockSpec((TN, G), lambda i: (i, 0)),
                pl.BlockSpec((1, G), lambda i: (0, 0)),
                pl.BlockSpec((1, G), lambda i: (0, 0)),
                pl.BlockSpec((G, G), lambda i: (0, 0)),
            ],
            out_specs=pl.BlockSpec((TN, G), lambda i: (i, 0)),
            compiler_params=cparams,
        )(x2, w2, b2, m)
    else:
        out = pl.pallas_call(
            functools.partial(_ln_channels_last_kernel, eps=float(eps)),
            out_shape=jax.ShapeDtypeStruct((Np, G), x.dtype),
            grid=grid,
            in_specs=[
                pl.BlockSpec((TN, G), lambda i: (i, 0)),
                pl.BlockSpec((1, G), lambda i: (0, 0)),
                pl.BlockSpec((1, G), lambda i: (0, 0)),
            ],
            out_specs=pl.BlockSpec((TN, G), lambda i: (i, 0)),
            compiler_params=cparams,
        )(x2, w2, b2)
    return out.reshape(*lead, C)


def layer_norm(x, weight, bias, *, eps=1e-6, data_format="channels_last"):
    """Forward pass of the reference LayerNorm module."""
    if data_format == "channels_last":
        return _layer_norm_channels_last(x, weight, bias, eps)
    elif data_format == "channels_first":
        return _layer_norm_channels_first(x, weight, bias, eps)
    raise ValueError(f"not support data format '{data_format}'")


# --------------------------------------------------------------------------
# Test
# --------------------------------------------------------------------------
if __name__ == "__main__":
    key = jax.random.PRNGKey(0)
    k1, k2, k3, k4, k5, k6, k7, k8, k9 = jax.random.split(key, 9)
    eps = 1e-6

    # ---- channels_first: NCHW input, normalize over the channel dim --------
    B, C, H, W = 2, 4, 16, 16
    x_cf = jax.random.normal(k1, (B, C, H, W), jnp.float32)
    w_cf = 1.0 + 0.1 * jax.random.normal(k2, (C,), jnp.float32)
    b_cf = 0.1 * jax.random.normal(k3, (C,), jnp.float32)

    ln_cf = jax.jit(functools.partial(layer_norm, eps=eps,
                                      data_format="channels_first"))
    out_cf = jax.block_until_ready(ln_cf(x_cf, w_cf, b_cf))

    mean = x_cf.mean(1, keepdims=True)
    var = ((x_cf - mean) ** 2).mean(1, keepdims=True)
    ref_cf = ((x_cf - mean) / jnp.sqrt(var + eps)
              * w_cf[None, :, None, None] + b_cf[None, :, None, None])
    assert out_cf.shape == (B, C, H, W) and out_cf.dtype == jnp.float32
    assert bool(jnp.allclose(out_cf, ref_cf, atol=1e-5, rtol=1e-5))

    # ---- channels_last, small C (packed lane-dense path) -------------------
    C2 = 32
    x_cl = jax.random.normal(k4, (B, H, W, C2), jnp.float32)
    w_cl = 1.0 + 0.1 * jax.random.normal(k5, (C2,), jnp.float32)
    b_cl = 0.1 * jax.random.normal(k6, (C2,), jnp.float32)

    ln_cl = jax.jit(functools.partial(layer_norm, eps=eps,
                                      data_format="channels_last"))
    out_cl = jax.block_until_ready(ln_cl(x_cl, w_cl, b_cl))

    mean_l = x_cl.mean(-1, keepdims=True)
    var_l = ((x_cl - mean_l) ** 2).mean(-1, keepdims=True)
    ref_cl = (x_cl - mean_l) / jnp.sqrt(var_l + eps) * w_cl + b_cl
    assert out_cl.shape == (B, H, W, C2) and out_cl.dtype == jnp.float32
    assert bool(jnp.allclose(out_cl, ref_cl, atol=1e-5, rtol=1e-5))

    # ---- channels_last, C = 128 (unpacked lane-reduce path) ----------------
    C3, H3, W3 = 128, 4, 4
    x_cl2 = jax.random.normal(k7, (B, H3, W3, C3), jnp.float32)
    w_cl2 = 1.0 + 0.1 * jax.random.normal(k8, (C3,), jnp.float32)
    b_cl2 = 0.1 * jax.random.normal(k9, (C3,), jnp.float32)

    out_cl2 = jax.block_until_ready(ln_cl(x_cl2, w_cl2, b_cl2))

    mean_l2 = x_cl2.mean(-1, keepdims=True)
    var_l2 = ((x_cl2 - mean_l2) ** 2).mean(-1, keepdims=True)
    ref_cl2 = (x_cl2 - mean_l2) / jnp.sqrt(var_l2 + eps) * w_cl2 + b_cl2
    assert out_cl2.shape == (B, H3, W3, C3) and out_cl2.dtype == jnp.float32
    assert bool(jnp.allclose(out_cl2, ref_cl2, atol=1e-5, rtol=1e-5))

    print("KERNEL_OK")
</pallas_src>

<mosaic_0001>
module attributes {stable_mosaic.version = 11 : i64} {
  func.func @_ln_channels_first_kernel(%arg0: i32, %arg1: i32, %arg2: memref<1x4x256xf32, #tpu.memory_space<vmem>>, %arg3: memref<4x1xf32, #tpu.memory_space<vmem>>, %arg4: memref<4x1xf32, #tpu.memory_space<vmem>>, %arg5: memref<1x4x256xf32, #tpu.memory_space<vmem>>) attributes {dimension_semantics = [#tpu.dimension_semantics<parallel>, #tpu.dimension_semantics<parallel>], iteration_bounds = array<i64: 2, 1>, scalar_prefetch = 0 : i64, scratch_operands = 0 : i64, tpu.core_type = #tpu.core_type<tc>, window_params = [{transform_indices = @transform_0, window_bounds = array<i64: 1, 4, 256>}, {pipeline_mode = #tpu.pipeline_mode<synchronous>, transform_indices = @transform_1, window_bounds = array<i64: 4, 1>}, {pipeline_mode = #tpu.pipeline_mode<synchronous>, transform_indices = @transform_2, window_bounds = array<i64: 4, 1>}, {transform_indices = @transform_3, window_bounds = array<i64: 1, 4, 256>}]} {
    %c0 = arith.constant 0 : index
    %c0_0 = arith.constant 0 : index
    %c0_1 = arith.constant 0 : index
    %0 = vector.load %arg2[%c0, %c0_0, %c0_1] : memref<1x4x256xf32, #tpu.memory_space<vmem>>, vector<1x4x256xf32>
    %1 = vector.shape_cast %0 : vector<1x4x256xf32> to vector<4x256xf32>
    %cst = arith.constant dense<0.000000e+00> : vector<256xf32>
    %2 = vector.multi_reduction <add>, %1, %cst [0] : vector<4x256xf32> to vector<256xf32>
    %3 = vector.shape_cast %2 : vector<256xf32> to vector<1x256xf32>
    %cst_2 = arith.constant 4.000000e+00 : f32
    %4 = vector.broadcast %cst_2 : f32 to vector<1x256xf32>
    %5 = arith.divf %3, %4 : vector<1x256xf32>
    %6 = vector.broadcast %5 : vector<1x256xf32> to vector<4x256xf32>
    %7 = arith.subf %1, %6 : vector<4x256xf32>
    %8 = arith.mulf %7, %7 : vector<4x256xf32>
    %cst_3 = arith.constant dense<0.000000e+00> : vector<256xf32>
    %9 = vector.multi_reduction <add>, %8, %cst_3 [0] : vector<4x256xf32> to vector<256xf32>
    %10 = vector.shape_cast %9 : vector<256xf32> to vector<1x256xf32>
    %cst_4 = arith.constant 4.000000e+00 : f32
    %11 = vector.broadcast %cst_4 : f32 to vector<1x256xf32>
    %12 = arith.divf %10, %11 : vector<1x256xf32>
    %cst_5 = arith.constant 9.99999997E-7 : f32
    %13 = vector.broadcast %cst_5 : f32 to vector<1x256xf32>
    %14 = arith.addf %12, %13 : vector<1x256xf32>
    %15 = math.rsqrt %14 : vector<1x256xf32>
    %c0_6 = arith.constant 0 : index
    %c0_7 = arith.constant 0 : index
    %16 = vector.load %arg3[%c0_6, %c0_7] : memref<4x1xf32, #tpu.memory_space<vmem>>, vector<4x1xf32>
    %c0_8 = arith.constant 0 : index
    %c0_9 = arith.constant 0 : index
    %17 = vector.load %arg4[%c0_8, %c0_9] : memref<4x1xf32, #tpu.memory_space<vmem>>, vector<4x1xf32>
    %18 = vector.broadcast %15 : vector<1x256xf32> to vector<4x256xf32>
    %19 = arith.mulf %7, %18 : vector<4x256xf32>
    %20 = vector.broadcast %16 : vector<4x1xf32> to vector<4x256xf32>
    %21 = arith.mulf %19, %20 : vector<4x256xf32>
    %22 = vector.broadcast %17 : vector<4x1xf32> to vector<4x256xf32>
    %23 = arith.addf %21, %22 : vector<4x256xf32>
    %c0_10 = arith.constant 0 : index
    %c0_11 = arith.constant 0 : index
    %c0_12 = arith.constant 0 : index
    %24 = vector.load %arg5[%c0_10, %c0_11, %c0_12] : memref<1x4x256xf32, #tpu.memory_space<vmem>>, vector<1x4x256xf32>
    %25 = vector.shape_cast %24 : vector<1x4x256xf32> to vector<4x256xf32>
    %26 = vector.shape_cast %23 : vector<4x256xf32> to vector<1x4x256xf32>
    tpu.vector_store %arg5[%c0_10, %c0_11, %c0_12], %26 {strides = array<i32>} : memref<1x4x256xf32, #tpu.memory_space<vmem>>, vector<1x4x256xf32>,
    return
  }
  func.func @transform_0(%arg0: i32, %arg1: i32) -> (i32, i32, i32) {
    %c0_i32 = arith.constant 0 : i32
    %c0_i32_0 = arith.constant 0 : i32
    return %arg0, %c0_i32, %arg1 : i32, i32, i32
  }
  func.func @transform_1(%arg0: i32, %arg1: i32) -> (i32, i32) {
    %c0_i32 = arith.constant 0 : i32
    %c0_i32_0 = arith.constant 0 : i32
    %c0_i32_1 = arith.constant 0 : i32
    return %c0_i32, %c0_i32_0 : i32, i32
  }
  func.func @transform_2(%arg0: i32, %arg1: i32) -> (i32, i32) {
    %c0_i32 = arith.constant 0 : i32
    %c0_i32_0 = arith.constant 0 : i32
    %c0_i32_1 = arith.constant 0 : i32
    return %c0_i32, %c0_i32_0 : i32, i32
  }
  func.func @transform_3(%arg0: i32, %arg1: i32) -> (i32, i32, i32) {
    %c0_i32 = arith.constant 0 : i32
    %c0_i32_0 = arith.constant 0 : i32
    return %arg0, %c0_i32, %arg1 : i32, i32, i32
  }
}

</mosaic_0001>

<llo_original>
// kernel: layer_norm.1
$region0: #{layer_norm.1}
  #allocation0 [shape = 'u32[]', space=smem, size = 0x4, offset = 0x4, fixed_abs, tag = 'smem constant byte address 0x4 - core index']
  #allocation1 [shape = 'u32[144,128]{1,0:T(1,128)}', space=vmem, size = 0x12000, scoped, tag = 'internal scratch']
  %s0 = inlined_call_operand.vmem [shape: f32[2,4,256], index: 0, kind: input, shape index: {}]
  %s1 = inlined_call_operand.vmem [shape: f32[4,1], index: 1, kind: input, shape index: {}]
  %s2 = inlined_call_operand.vmem [shape: f32[4,1], index: 2, kind: input, shape index: {}]
  %s3 = inlined_call_operand.vmem [shape: f32[2,4,256], index: 3, kind: output, shape index: {}]
  %s4 = sld [smem:[#allocation0]]
  $region45: #{layer_norm.1} parent=0
    _
  %s6 = ssub.s32 1, %s4
  %s7 = scalar_select 0, %s6, %s4
  loop: start=0, step=1, limit=4
  $region2: #{layer_norm.1} parent=0 // loop_pre_header
    _
  $region3: #{layer_norm.1} parent=0 // loop_header
    %s9 = sphi 0, %s13
    %p10 = scmp.ge.s32.totalorder %s9, 4
    %s16 = sphi 0, %s28
    %s17 = sphi 0, %s24
    %s18 = sphi 0, %s16
    %s19 = sphi 0, %s17
    %s20 = sphi 0, %s18
    %s21 = sphi 0, %s19
    %s33 = sphi 0, %s35
    %s36 = sphi 0, %s33
    %s37 = sphi 0, %s36
    %s53 = sphi 0, %s37
    %s57 = sphi 0, %s57
    %s59 = sphi 0, %s57
    %s60 = sphi 0, %s59
    %s74 = sphi 0, %s60
    %s78 = sphi 0, %s78
    %s80 = sphi 0, %s78
    %s81 = sphi 0, %s80
    %s95 = sphi 0, %s81
    %s103 = sphi 0, %s105
    %s106 = sphi 0, %s103
    %s107 = sphi 0, %s106
    %s123 = sphi 0, %s107
  $region4: #{layer_norm.1} parent=0 // loop_header_branch
    %12 = sbr.rel (%p10) target = $region8
  $region5: #{layer_norm.1} parent=0 // loop_body
    %s14 = ssub.s32 %s9, 1
    %s15 = ssub.s32 %s9, 2
    %s22 = sadd.s32 1, %s17
    %p23 = scmp.ge.s32.totalorder %s22, 1
    %s24 = scalar_select %p23, 0, %s22
    %s25 = sadd.s32 1, %s16
    %s26 = scalar_select %p23, %s25, %s16
    %p27 = scmp.ge.s32.totalorder %s26, 2
    %s28 = scalar_select %p27, 0, %s26
    %s29 = ssub.s32 %s16, %s28
    %s30 = ssub.s32 %s17, %s24
    %s31 = sor.u32 %s29, %s30
    %p32 = scmp.eq.s32.totalorder %s31, 0
    %s34 = sadd.s32 %s33, 1
    %s35 = scalar_select %p32, %s33, %s34
    %p38 = pneg %p32
    %p39 = scmp.eq.s32.totalorder %s9, 1
    %p40 = por %p38, %p39
    %p41 = scmp.ne.s32.totalorder %s33, %s36
    %p42 = scmp.eq.s32.totalorder %s9, 0
    %p43 = por %p41, %p42
    %p44 = scmp.ne.s32.totalorder %s33, %s36
    %p45 = scmp.eq.s32.totalorder %s14, 1
    %p46 = por %p44, %p45
    %p47 = scmp.ne.s32.totalorder %s36, %s37
    %p48 = scmp.eq.s32.totalorder %s14, 0
    %p49 = por %p47, %p48
    %p50 = scmp.ne.s32.totalorder %s36, %s37
    %p51 = scmp.eq.s32.totalorder %s15, 1
    %p52 = por %p50, %p51
    %p54 = scmp.ne.s32.totalorder %s37, %s53
    %p55 = scmp.eq.s32.totalorder %s15, 0
    %p56 = por %p54, %p55
    %s58 = sadd.s32 %s57, 1
    %p61 = scmp.eq.s32.totalorder %s9, 1
    %p62 = scmp.ne.s32.totalorder %s57, %s59
    %p63 = scmp.eq.s32.totalorder %s9, 0
    %p64 = por %p62, %p63
    %p65 = scmp.ne.s32.totalorder %s57, %s59
    %p66 = scmp.eq.s32.totalorder %s14, 1
    %p67 = por %p65, %p66
    %p68 = scmp.ne.s32.totalorder %s59, %s60
    %p69 = scmp.eq.s32.totalorder %s14, 0
    %p70 = por %p68, %p69
    %p71 = scmp.ne.s32.totalorder %s59, %s60
    %p72 = scmp.eq.s32.totalorder %s15, 1
    %p73 = por %p71, %p72
    %p75 = scmp.ne.s32.totalorder %s60, %s74
    %p76 = scmp.eq.s32.totalorder %s15, 0
    %p77 = por %p75, %p76
    %s79 = sadd.s32 %s78, 1
    %p82 = scmp.eq.s32.totalorder %s9, 1
    %p83 = scmp.ne.s32.totalorder %s78, %s80
    %p84 = scmp.eq.s32.totalorder %s9, 0
    %p85 = por %p83, %p84
    %p86 = scmp.ne.s32.totalorder %s78, %s80
    %p87 = scmp.eq.s32.totalorder %s14, 1
    %p88 = por %p86, %p87
    %p89 = scmp.ne.s32.totalorder %s80, %s81
    %p90 = scmp.eq.s32.totalorder %s14, 0
    %p91 = por %p89, %p90
    %p92 = scmp.ne.s32.totalorder %s80, %s81
    %p93 = scmp.eq.s32.totalorder %s15, 1
    %p94 = por %p92, %p93
    %p96 = scmp.ne.s32.totalorder %s81, %s95
    %p97 = scmp.eq.s32.totalorder %s15, 0
    %p98 = por %p96, %p97
    %s99 = ssub.s32 %s16, %s28
    %s100 = ssub.s32 %s17, %s24
    %s101 = sor.u32 %s99, %s100
    %p102 = scmp.eq.s32.totalorder %s101, 0
    %s104 = sadd.s32 %s103, 1
    %s105 = scalar_select %p102, %s103, %s104
    %p108 = pneg %p102
    %p109 = scmp.eq.s32.totalorder %s9, 1
    %p110 = por %p108, %p109
    %p111 = scmp.ne.s32.totalorder %s103, %s106
    %p112 = scmp.eq.s32.totalorder %s9, 0
    %p113 = por %p111, %p112
    %p114 = scmp.ne.s32.totalorder %s103, %s106
    %p115 = scmp.eq.s32.totalorder %s14, 1
    %p116 = por %p114, %p115
    %p117 = scmp.ne.s32.totalorder %s106, %s107
    %p118 = scmp.eq.s32.totalorder %s14, 0
    %p119 = por %p117, %p118
    %p120 = scmp.ne.s32.totalorder %s106, %s107
    %p121 = scmp.eq.s32.totalorder %s15, 1
    %p122 = por %p120, %p121
    %p124 = scmp.ne.s32.totalorder %s107, %s123
    %p125 = scmp.eq.s32.totalorder %s15, 0
    %p126 = por %p124, %p125
    %p127 = scmp.le.s32.totalorder 1, %s9
    %p128 = scmp.lt.s32.totalorder %s9, 3
    %p129 = pnand %p127, %p128
    %p130 = pneg %p129
    // Predicated region
    $region9: #{layer_norm.1} parent=5 // pred_check
      _
    $region10: #{layer_norm.1} parent=5 // pred_check_branch
      %132 = sbr.rel (%p129) target = $region12
    $region11: #{layer_norm.1} parent=5 // pred_region
      %s133 = ssub.s32 %s9, 1
      // Predicated region
      $region13: #{layer_norm.1} parent=11 // pred_check
        %p134 = pneg %p70
      $region14: #{layer_norm.1} parent=11 // pred_check_branch
        %136 = sbr.rel (%p134) target = $region16
      $region15: #{layer_norm.1} parent=11 // pred_region
        _
      $region16: #{layer_norm.1} parent=11 // pred_fallthru
        _
      // Predicated region
      $region17: #{layer_norm.1} parent=11 // pred_check
        %p137 = pneg %p91
      $region18: #{layer_norm.1} parent=11 // pred_check_branch
        %139 = sbr.rel (%p137) target = $region20
      $region19: #{layer_norm.1} parent=11 // pred_region
        _
      $region20: #{layer_norm.1} parent=11 // pred_fallthru
        _
    $region12: #{layer_norm.1} parent=5 // pred_fallthru
      _
    %p140 = scmp.lt.s32.totalorder %s9, 2
    // Predicated region
    $region21: #{layer_norm.1} parent=5 // pred_check
      %p141 = pneg %p140
    $region22: #{layer_norm.1} parent=5 // pred_check_branch
      %143 = sbr.rel (%p141) target = $region24
    $region23: #{layer_norm.1} parent=5 // pred_region
      // Predicated region
      $region25: #{layer_norm.1} parent=23 // pred_check
        %p144 = pneg %p43
      $region26: #{layer_norm.1} parent=23 // pred_check_branch
        %146 = sbr.rel (%p144) target = $region28
      $region27: #{layer_norm.1} parent=23 // pred_region
        %s147 = smul.u32 2, %s17
        %p148 = scmp.lt.s32.totalorder %s16, 1
        %s149 = scalar_select %p148, %s16, 1
        %p150 = scmp.lt.s32.totalorder %s147, 1
        %s151 = scalar_select %p150, %s147, 1
        %s152 = smul.addr %s149, 2
        %s153 = sadd.s32 %s151, %s152
        %s154 = smul.addr %s153, 4
        %s155 = scalar_lea.vmem %s0, %s154
        %s156 = smul.u32 2, %s17
      $region28: #{layer_norm.1} parent=23 // pred_fallthru
        _
    $region24: #{layer_norm.1} parent=5 // pred_fallthru
      _
    %p157 = scmp.le.s32.totalorder 1, %s9
    %p158 = scmp.lt.s32.totalorder %s9, 3
    %p159 = pnand %p157, %p158
    %p160 = pneg %p159
    // Predicated region
    $region29: #{layer_norm.1} parent=5 // pred_check
      _
    $region30: #{layer_norm.1} parent=5 // pred_check_branch
      %162 = sbr.rel (%p159) target = $region32
    $region31: #{layer_norm.1} parent=5 // pred_region
      %s163 = ssub.s32 %s9, 1
      %s164 = smul.u32 2, %s19
      %p165 = scmp.lt.s32.totalorder %s18, 1
      %s166 = scalar_select %p165, %s18, 1
      %p167 = scmp.lt.s32.totalorder %s164, 1
      %s168 = scalar_select %p167, %s164, 1
      %s169 = smul.addr %s166, 2
      %s170 = sadd.s32 %s168, %s169
      %s171 = smul.addr %s170, 4
      %s172 = scalar_lea.vmem %s0, %s171
      %p173 = pneg %p49
      %p174 = pneg %p46
      %p175 = pneg %p70
      %p176 = pneg %p67
      %p177 = pneg %p91
      %p178 = pneg %p88
      %p179 = pneg %p119
      %p180 = pneg %p116
      %s181 = smul.u32 2, %s19
      %p182 = scmp.lt.s32.totalorder %s18, 1
      %s183 = scalar_select %p182, %s18, 1
      %p184 = scmp.lt.s32.totalorder %s181, 1
      %s185 = scalar_select %p184, %s181, 1
      %s186 = smul.addr %s183, 2
      %s187 = sadd.s32 %s185, %s186
      %s188 = smul.addr %s187, 4
      %s189 = scalar_lea.vmem %s3, %s188
      %s190 = smul.u32 2, %s19
      %p191 = scmp.lt.s32.totalorder %s18, 1
      %s192 = scalar_select %p191, %s18, 1
      %p193 = scmp.lt.s32.totalorder %s190, 1
      %s194 = scalar_select %p193, %s190, 1
      %s195 = smul.addr %s192, 2
      %s196 = sadd.s32 %s194, %s195
      %s197 = smul.addr %s196, 4
      %s198 = scalar_lea.vmem %s0, %s197
      %s199 = smul.u32 2, %s19
      %s200 = smul.u32 2, %s19
      %p201 = scmp.lt.s32.totalorder %s18, 1
      %s202 = scalar_select %p201, %s18, 1
      %p203 = scmp.lt.s32.totalorder %s200, 1
      %s204 = scalar_select %p203, %s200, 1
      %s205 = smul.addr %s202, 2
      %s206 = sadd.s32 %s204, %s205
      %s207 = smul.addr %s206, 4
      %s208 = scalar_lea.vmem %s3, %s207
      %s209 = smul.u32 2, %s19
      %v210 = vld [vmem:[%s198] sm:$0xff]
      %v212 = vcombine.high %v210, %v210
      %vm214 = vcmask 1043456
      %v215 = vsel %vm214, %v210, 0.0
      %v216 = vrot.slane %v215, 4
      %v217 = vadd.f32 %v215, %v216
      %v218 = vrot.slane %v217, 2
      %v219 = vadd.f32 %v217, %v218
      %v220 = vrot.slane %v219, 1
      %v221 = vadd.f32 %v219, %v220
      %v222 = vsel %vm214, %v212, 0.0
      %v223 = vrot.slane %v222, 4
      %v224 = vadd.f32 %v222, %v223
      %v225 = vrot.slane %v224, 2
      %v226 = vadd.f32 %v224, %v225
      %v227 = vrot.slane %v226, 1
      %v228 = vadd.f32 %v226, %v227
      %v229 = vrcp.pop 4.0
      %v230 = vmul.f32 %v221, %v229
      %v231 = vmul.f32 %v228, %v229
      %v234 = vcombine.low %v230, %v231
      %v236 = vsub.f32 %v210, %v234
      %v237 = vmul.f32 %v236, %v236
      %v239 = vcombine.high %v237, %v237
      %v241 = vsel %vm214, %v237, 0.0
      %v242 = vrot.slane %v241, 4
      %v243 = vadd.f32 %v241, %v242
      %v244 = vrot.slane %v243, 2
      %v245 = vadd.f32 %v243, %v244
      %v246 = vrot.slane %v245, 1
      %v247 = vadd.f32 %v245, %v246
      %v248 = vsel %vm214, %v239, 0.0
      %v249 = vrot.slane %v248, 4
      %v250 = vadd.f32 %v248, %v249
      %v251 = vrot.slane %v250, 2
      %v252 = vadd.f32 %v250, %v251
      %v253 = vrot.slane %v252, 1
      %v254 = vadd.f32 %v252, %v253
      %v255 = vmul.f32 %v247, %v229
      %v256 = vmul.f32 %v254, %v229
      %v257 = vadd.f32 %v255, 1e-06
      %v258 = vadd.f32 %v256, 1e-06
      %v259 = vrsqrt.pop %v257
      %v260 = vrsqrt.pop %v258
      %v261 = vld [vmem:[%s1] sm:$0xf]
      %v262 = vld [vmem:[%s2] sm:$0xf]
      %v265 = vcombine.low %v259, %v260
      %v267 = vmul.f32 %v236, %v265
      %269 = vset.pattern.permute.xlu0 0
      %270 = vperm.xlu0 %269, %v261
      %v271 = vpop.permute.xlu0 %270
      %v273 = vunpack.c.l.s4 839922192
      %v274 = vunpack.c.0.s8 %v273
      %v275 = vlaneseq
      %v276 = vshrl.u32 %v275, 7
      %v277 = vsub.s32 %v274, %v276
      %v278 = vrot.slane %v271, %v277
      %v280 = vmul.f32 %v267, %v278
      %282 = vset.pattern.permute.xlu0 0
      %283 = vperm.xlu0 %282, %v262
      %v284 = vpop.permute.xlu0 %283
      %v286 = vunpack.c.l.s4 839922192
      %v287 = vunpack.c.0.s8 %v286
      %v288 = vlaneseq
      %v289 = vshrl.u32 %v288, 7
      %v290 = vsub.s32 %v287, %v289
      %v291 = vrot.slane %v284, %v290
      %v293 = vadd.f32 %v280, %v291
      %294 = vst [vmem:[%s208] sm:$0xff] %v293
      %s295 = smul.u32 2, %s19
      %p296 = scmp.lt.s32.totalorder %s18, 1
      %s297 = scalar_select %p296, %s18, 1
      %p298 = scmp.lt.s32.totalorder %s295, 1
      %s299 = scalar_select %p298, %s295, 1
      %s300 = smul.addr %s297, 2
      %s301 = sadd.s32 %s299, %s300
      %s302 = smul.addr %s301, 4
      %s303 = scalar_lea.vmem %s3, %s302
      // Predicated region
      $region33: #{layer_norm.1} parent=31 // pred_check
        %p304 = pneg %p116
      $region34: #{layer_norm.1} parent=31 // pred_check_branch
        %306 = sbr.rel (%p304) target = $region36
      $region35: #{layer_norm.1} parent=31 // pred_region
        %s307 = smul.u32 2, %s19
      $region36: #{layer_norm.1} parent=31 // pred_fallthru
        _
    $region32: #{layer_norm.1} parent=5 // pred_fallthru
      _
    %p308 = scmp.le.s32.totalorder 2, %s9
    // Predicated region
    $region37: #{layer_norm.1} parent=5 // pred_check
      %p309 = pneg %p308
    $region38: #{layer_norm.1} parent=5 // pred_check_branch
      %311 = sbr.rel (%p309) target = $region40
    $region39: #{layer_norm.1} parent=5 // pred_region
      %s312 = ssub.s32 %s9, 2
      // Predicated region
      $region41: #{layer_norm.1} parent=39 // pred_check
        %p313 = pneg %p122
      $region42: #{layer_norm.1} parent=39 // pred_check_branch
        %315 = sbr.rel (%p313) target = $region44
      $region43: #{layer_norm.1} parent=39 // pred_region
        %s316 = smul.u32 2, %s21
        %p317 = scmp.lt.s32.totalorder %s20, 1
        %s318 = scalar_select %p317, %s20, 1
        %p319 = scmp.lt.s32.totalorder %s316, 1
        %s320 = scalar_select %p319, %s316, 1
        %s321 = smul.addr %s318, 2
        %s322 = sadd.s32 %s320, %s321
        %s323 = smul.addr %s322, 4
        %s324 = scalar_lea.vmem %s3, %s323
      $region44: #{layer_norm.1} parent=39 // pred_fallthru
        _
    $region40: #{layer_norm.1} parent=5 // pred_fallthru
      _
  $region6: #{layer_norm.1} parent=0 // loop_footer
    %s13 = sadd.s32 1, %s9
  $region7: #{layer_norm.1} parent=0 // loop_footer_branch
    %8 = sbr.rel target = $region3
  $region8: #{layer_norm.1} parent=0 // loop_exit
    _

</llo_original>
